<compile_context>
chip_gen: v7x
topology: tpu7x:2x2x1
jax: 0.10.0
libtpu: 0.0.40
codegen_flags: <defaults>
</compile_context>

<pallas_src>
import jax
import jax.numpy as jnp
from jax import lax
from jax.experimental import pallas as pl
from jax.experimental.pallas import tpu as pltpu


def _round_up(x, m):
    return ((x + m - 1) // m) * m


def _round_down(x, m):
    return max(m, (x // m) * m)


def _make_kernel(fuse_normalize):
    def kernel(x_ref, w_ref, o_ref):
        # x_ref: (TM, D) batch tile
        # w_ref: (TN, D) prototype weight tile in native nn.Linear layout
        # o_ref: (TM, TN) logits tile
        w = w_ref[...]
        if fuse_normalize:
            # Fused F.normalize(w, dim=1): rsqrt runs on the EUP (free slot in
            # this MXU/HBM-bound kernel); the full D row is already in VMEM.
            wf = w.astype(jnp.float32)
            ss = jnp.sum(wf * wf, axis=1, keepdims=True)
            w = (wf * lax.rsqrt(jnp.maximum(ss, 1e-24))).astype(w.dtype)
        # Contract last dims of both operands: out = x @ w^T directly on the
        # MXU, no explicit transpose of W (verified no vxpose needed for this
        # dimension_numbers choice).
        o_ref[...] = lax.dot_general(
            x_ref[...],
            w,
            dimension_numbers=(((1,), (1,)), ((), ())),
            preferred_element_type=jnp.float32,
        ).astype(o_ref.dtype)

    return kernel


def _vmem_budget_bytes():
    """Generation-aware VMEM budget for double-buffered tiles.

    Derived from physical VMEM (64 MiB/core on v7x, 128 MiB on v5e/v6e) with
    headroom for Mosaic internal scratch, instead of a fixed constant.
    """
    try:
        info = pltpu.get_tpu_info()
        phys = getattr(info, "vmem_capacity_bytes", 64 * 1024 * 1024)
    except Exception:
        phys = 64 * 1024 * 1024  # conservative: v7x per-TensorCore physical
    return max(8 << 20, min(phys // 2, 48 << 20))


def _choose_tiles(M, D, N, in_itemsize, out_itemsize, budget):
    """Pick (tile_m, tile_n) to minimize HBM traffic under the VMEM budget."""
    m_cap = _round_up(M, 8)
    n_full = _round_up(N, 128)

    def fits(tm, tn):
        # Each BlockSpec operand is double-buffered by the pipeline.
        return 2 * ((tm + tn) * D * in_itemsize + tm * tn * out_itemsize) <= budget

    # Large batch tile (single block when the batch is small enough).
    tile_m = m_cap if m_cap <= 512 else 512
    # Whole weight resident along N whenever it fits -> W DMA'd exactly once.
    tile_n = n_full

    # Shrink tile_n FIRST: it reduces VMEM without adding any HBM traffic.
    while not fits(tile_m, tile_n) and tile_n > 128:
        tile_n = _round_down(tile_n // 2, 128)
    # Shrink tile_m only as a last resort: more M tiles => W re-streamed from
    # HBM once per extra M tile in this (i outer, j inner) grid.
    while not fits(tile_m, tile_n) and tile_m > 8:
        tile_m = _round_down(tile_m // 2, 8)

    # TODO(synk): for output_dim >> 512 add a K grid axis ("arbitrary") with an
    # f32 VMEM accumulator + pl.when init/finalize instead of collapsing tile_m.
    return tile_m, tile_n


def prototypes_forward(x, weight, *, compute_dtype=None, out_dtype=jnp.float32,
                       fuse_normalize=False):
    """x: (M, D) features, weight: (N, D) in PyTorch nn.Linear layout.

    Returns (M, N) = x @ weight.T (optionally with weight rows L2-normalized
    in-kernel when fuse_normalize=True).  compute_dtype=jnp.bfloat16 halves
    input HBM traffic (f32 accumulation kept); out_dtype=jnp.bfloat16 halves
    the dominant output-write traffic.  Defaults keep full f32 semantics.
    """
    M, D = x.shape
    N, D_w = weight.shape
    assert D == D_w, "output_dim mismatch"

    if compute_dtype is not None:
        x = x.astype(compute_dtype)
        weight = weight.astype(compute_dtype)

    in_itemsize = jnp.dtype(x.dtype).itemsize
    out_itemsize = jnp.dtype(out_dtype).itemsize
    budget = _vmem_budget_bytes()
    tile_m, tile_n = _choose_tiles(M, D, N, in_itemsize, out_itemsize, budget)

    # Ragged last blocks are handled by Pallas (padded reads, masked writes):
    # no jnp.pad of x/weight and no post-call slice of the (dominant) output.
    grid = (pl.cdiv(M, tile_m), pl.cdiv(N, tile_n))

    flops = 2 * M * N * D
    bytes_accessed = (M * D + N * D) * in_itemsize + M * N * out_itemsize

    out = pl.pallas_call(
        _make_kernel(fuse_normalize),
        out_shape=jax.ShapeDtypeStruct((M, N), out_dtype),
        grid_spec=pltpu.PrefetchScalarGridSpec(
            num_scalar_prefetch=0,
            grid=grid,
            in_specs=[
                pl.BlockSpec((tile_m, D), lambda i, j: (i, 0)),   # x tile
                pl.BlockSpec((tile_n, D), lambda i, j: (j, 0)),   # W tile (N, D)
            ],
            out_specs=pl.BlockSpec((tile_m, tile_n), lambda i, j: (i, j)),
        ),
        compiler_params=pltpu.CompilerParams(
            # No reduction axis / accumulator: both axes are independent, so
            # v7x's two TensorCores may shard either one.
            dimension_semantics=("parallel", "parallel"),
            vmem_limit_bytes=min(budget + (8 << 20), 56 << 20),
        ),
        cost_estimate=pl.CostEstimate(
            flops=flops, transcendentals=0, bytes_accessed=bytes_accessed),
    )(x, weight)

    return out


def normalize_prototypes(weight):
    # Functional mirror of Prototypes.normalize_prototypes (row-wise L2 norm).
    # The same math is also available fused in-kernel via fuse_normalize=True.
    norm = jnp.sqrt(jnp.sum(weight * weight, axis=1, keepdims=True))
    return weight / jnp.maximum(norm, 1e-12)


if __name__ == "__main__":
    key = jax.random.PRNGKey(0)
    kx, kw, kx2, kw2 = jax.random.split(key, 4)

    # Small shapes consistent with the module: output_dim=32, num_prototypes=16,
    # batch of 16 feature vectors.
    output_dim = 32
    num_prototypes = 16
    batch = 16

    x = jax.random.normal(kx, (batch, output_dim), dtype=jnp.float32)
    w_raw = jax.random.normal(kw, (num_prototypes, output_dim), dtype=jnp.float32)
    w_raw = w_raw * (1.0 / jnp.sqrt(output_dim))
    weight = normalize_prototypes(w_raw)

    # 1) Plain forward (matches nn.Linear(bias=False) with normalized weights).
    out = jax.block_until_ready(prototypes_forward(x, weight))
    ref = x @ weight.T
    assert out.shape == (batch, num_prototypes)
    assert jnp.allclose(out, ref, atol=1e-5, rtol=1e-5)

    # 2) Fused normalize path: normalize_prototypes + forward in one kernel.
    out_fused = jax.block_until_ready(
        prototypes_forward(x, w_raw, fuse_normalize=True))
    assert jnp.allclose(out_fused, ref, atol=1e-4, rtol=1e-4)

    # 3) Awkward shapes (batch / prototype count not aligned to 8 / 128):
    #    exercises the ragged-block (masked write) path with no pads/slices.
    batch2, dim2, protos2 = 37, 48, 50
    x2 = jax.random.normal(kx2, (batch2, dim2), dtype=jnp.float32)
    w2 = normalize_prototypes(
        jax.random.normal(kw2, (protos2, dim2), dtype=jnp.float32))
    out2 = jax.block_until_ready(prototypes_forward(x2, w2))
    ref2 = x2 @ w2.T
    assert out2.shape == (batch2, protos2)
    assert jnp.allclose(out2, ref2, atol=1e-5, rtol=1e-5)

    print("KERNEL_OK")
</pallas_src>

<mosaic_0001>
module attributes {stable_mosaic.version = 11 : i64} {
  func.func @kernel(%arg0: i32, %arg1: i32, %arg2: memref<16x32xf32, #tpu.memory_space<vmem>>, %arg3: memref<128x32xf32, #tpu.memory_space<vmem>>, %arg4: memref<16x128xf32, #tpu.memory_space<vmem>>) attributes {dimension_semantics = [#tpu.dimension_semantics<parallel>, #tpu.dimension_semantics<parallel>], iteration_bounds = array<i64: 1, 1>, scalar_prefetch = 0 : i64, scratch_operands = 0 : i64, tpu.core_type = #tpu.core_type<tc>, window_params = [{transform_indices = @transform_0, window_bounds = array<i64: 16, 32>}, {transform_indices = @transform_1, window_bounds = array<i64: 128, 32>}, {transform_indices = @transform_2, window_bounds = array<i64: 16, 128>}]} {
    %c0 = arith.constant 0 : index
    %c0_0 = arith.constant 0 : index
    %0 = vector.load %arg3[%c0, %c0_0] : memref<128x32xf32, #tpu.memory_space<vmem>>, vector<128x32xf32>
    %c0_1 = arith.constant 0 : index
    %c0_2 = arith.constant 0 : index
    %1 = vector.load %arg2[%c0_1, %c0_2] : memref<16x32xf32, #tpu.memory_space<vmem>>, vector<16x32xf32>
    %cst = arith.constant dense<0.000000e+00> : vector<16x128xf32>
    %2 = tpu.matmul %1, %0, %cst {dimension_numbers = #tpu.dot_dimension_numbers<[1], [1], [0], [0], [0, 0, 1, 0], [], []>} : vector<16x32xf32>, vector<128x32xf32>, vector<16x128xf32> -> vector<16x128xf32>
    %c0_3 = arith.constant 0 : index
    %c0_4 = arith.constant 0 : index
    %3 = vector.load %arg4[%c0_3, %c0_4] : memref<16x128xf32, #tpu.memory_space<vmem>>, vector<16x128xf32>
    tpu.vector_store %arg4[%c0_3, %c0_4], %2 {strides = array<i32>} : memref<16x128xf32, #tpu.memory_space<vmem>>, vector<16x128xf32>,
    return
  }
  func.func @transform_0(%arg0: i32, %arg1: i32) -> (i32, i32) {
    %c0_i32 = arith.constant 0 : i32
    %c0_i32_0 = arith.constant 0 : i32
    return %arg0, %c0_i32 : i32, i32
  }
  func.func @transform_1(%arg0: i32, %arg1: i32) -> (i32, i32) {
    %c0_i32 = arith.constant 0 : i32
    %c0_i32_0 = arith.constant 0 : i32
    return %arg1, %c0_i32 : i32, i32
  }
  func.func @transform_2(%arg0: i32, %arg1: i32) -> (i32, i32) {
    %c0_i32 = arith.constant 0 : i32
    return %arg0, %arg1 : i32, i32
  }
}

</mosaic_0001>

<llo_original>
// kernel: tpu_custom_call.1
$region0: #{tpu_custom_call.1}
  #allocation0 [shape = 'u32[]', space=smem, size = 0x4, offset = 0x4, fixed_abs, tag = 'smem constant byte address 0x4 - core index']
  #allocation1 [shape = 'u32[144,128]{1,0:T(1,128)}', space=vmem, size = 0x12000, scoped, tag = 'internal scratch']
  %s0 = inlined_call_operand.hbm [shape: f32[16,32], index: 0, kind: input, shape index: {}]
  %s1 = inlined_call_operand.hbm [shape: f32[16,32], index: 1, kind: input, shape index: {}]
  %s2 = inlined_call_operand.hbm [shape: f32[16,16], index: 2, kind: output, shape index: {}]
  %s3 = sld [smem:[#allocation0]]
  $region26: #{tpu_custom_call.1} parent=0
    _
  %s5 = ssub.s32 1, %s3
  %s6 = scalar_select 0, %s5, %s3
  $region1: #{tpu_custom_call.1} parent=0
    #allocation2 [shape = 'u8[8192]{0}', space=vmem, size = 0x2000, scoped, tag = 'input window, operand 0, single buffered']
    #allocation3 [shape = 's32[1]{0}', space=sflag, size = 0x4, scoped, tag = 'scoped memory for tpu_custom_call.1']
    #allocation4 [shape = 's32[1]{0}', space=sflag, size = 0x4, scoped, tag = 'scoped memory for tpu_custom_call.1']
    #allocation5 [shape = 'u8[65536]{0}', space=vmem, size = 0x10000, scoped, tag = 'input window, operand 1, single buffered']
    #allocation6 [shape = 's32[1]{0}', space=sflag, size = 0x4, scoped, tag = 'scoped memory for tpu_custom_call.1']
    #allocation7 [shape = 'u8[8192]{0}', space=vmem, size = 0x2000, scoped, tag = 'output window, operand 0, single buffered']
    %7 = vsyncpa [#allocation3], 0
    %8 = vsyncpa [#allocation6], 0
    %9 = vsyncpa [#allocation4], 0
    // Predicated region
    $region2: #{tpu_custom_call.1} parent=1 // pred_check
      _
    $region3: #{tpu_custom_call.1} parent=1 // pred_check_branch
      %11 = sbr.rel (0) target = $region5
    $region4: #{tpu_custom_call.1} parent=1 // pred_region
      %s13 = ssub.s32 256, 256
      %14 = vsyncadd [#allocation3], %s13
      %s15 = sshll.u32 [#allocation2], 4
      %s16 = int_to_ptr.vmem [resolvable:$true] %s15
      %21 = dma.hbm_to_vmem [thread:$0]  %s0, 256, %s16, [#allocation3], 128, 128, 8
    $region5: #{tpu_custom_call.1} parent=1 // pred_fallthru
      _
    // Predicated region
    $region6: #{tpu_custom_call.1} parent=1 // pred_check
      _
    $region7: #{tpu_custom_call.1} parent=1 // pred_check_branch
      %23 = sbr.rel (0) target = $region9
    $region8: #{tpu_custom_call.1} parent=1 // pred_region
      %s25 = ssub.s32 2048, 256
      %26 = vsyncadd [#allocation6], %s25
      %s27 = sshll.u32 [#allocation5], 4
      %s28 = int_to_ptr.vmem [resolvable:$true] %s27
      %33 = dma.hbm_to_vmem [thread:$0]  %s1, 256, %s28, [#allocation6], 128, 128, 8
    $region9: #{tpu_custom_call.1} parent=1 // pred_fallthru
      _
    // Predicated region
    $region10: #{tpu_custom_call.1} parent=1 // pred_check
      _
    $region11: #{tpu_custom_call.1} parent=1 // pred_check_branch
      %35 = sbr.rel (0) target = $region13
    $region12: #{tpu_custom_call.1} parent=1 // pred_region
      %36 = dma.done [#allocation3], 256
    $region13: #{tpu_custom_call.1} parent=1 // pred_fallthru
      _
    // Predicated region
    $region14: #{tpu_custom_call.1} parent=1 // pred_check
      _
    $region15: #{tpu_custom_call.1} parent=1 // pred_check_branch
      %38 = sbr.rel (0) target = $region17
    $region16: #{tpu_custom_call.1} parent=1 // pred_region
      %39 = dma.done [#allocation6], 2048
    $region17: #{tpu_custom_call.1} parent=1 // pred_fallthru
      _
    %v40 = vld [vmem:[#allocation5] sm:$0xff]
    %v41 = vld [vmem:[#allocation5 + $0x8] sm:$0xff]
    %v42 = vld [vmem:[#allocation5 + $0x10] sm:$0xff]
    %v43 = vld [vmem:[#allocation5 + $0x18] sm:$0xff]
    %v44 = vld [vmem:[#allocation5 + $0x20] sm:$0xff]
    %v45 = vld [vmem:[#allocation5 + $0x28] sm:$0xff]
    %v46 = vld [vmem:[#allocation5 + $0x30] sm:$0xff]
    %v47 = vld [vmem:[#allocation5 + $0x38] sm:$0xff]
    %v48 = vld [vmem:[#allocation5 + $0x40] sm:$0xff]
    %v49 = vld [vmem:[#allocation5 + $0x48] sm:$0xff]
    %v50 = vld [vmem:[#allocation5 + $0x50] sm:$0xff]
    %v51 = vld [vmem:[#allocation5 + $0x58] sm:$0xff]
    %v52 = vld [vmem:[#allocation5 + $0x60] sm:$0xff]
    %v53 = vld [vmem:[#allocation5 + $0x68] sm:$0xff]
    %v54 = vld [vmem:[#allocation5 + $0x70] sm:$0xff]
    %v55 = vld [vmem:[#allocation5 + $0x78] sm:$0xff]
    %v56 = vld [vmem:[#allocation2] sm:$0xff]
    %v57 = vld [vmem:[#allocation2 + $0x8] sm:$0xff]
    %vm58 = vcmask 261120
    %v60 = vsel %vm58, %v56, 0
    %v63 = vsel %vm58, %v57, 0
    %v66 = vsel %vm58, %v40, 0
    %v69 = vsel %vm58, %v41, 0
    %v72 = vsel %vm58, %v42, 0
    %v75 = vsel %vm58, %v43, 0
    %v78 = vsel %vm58, %v44, 0
    %v81 = vsel %vm58, %v45, 0
    %v84 = vsel %vm58, %v46, 0
    %v87 = vsel %vm58, %v47, 0
    %v90 = vsel %vm58, %v48, 0
    %v93 = vsel %vm58, %v49, 0
    %v96 = vsel %vm58, %v50, 0
    %v99 = vsel %vm58, %v51, 0
    %v102 = vsel %vm58, %v52, 0
    %v105 = vsel %vm58, %v53, 0
    %v108 = vsel %vm58, %v54, 0
    %v111 = vsel %vm58, %v55, 0
    %113 = vmatprep.subr.mxu0 0.0
    %114 = vmatpush1.xpose.msra.mxu0 %v66
    %115 = vmatprep.subr.mxu0 0.0
    %116 = vmatpush1.xpose.msra.mxu0 %v69
    %117 = vmatprep.subr.mxu0 0.0
    %118 = vmatpush1.xpose.msra.mxu0 %v72
    %119 = vmatprep.subr.mxu0 0.0
    %120 = vmatpush1.xpose.msra.mxu0 %v75
    %121 = vmatprep.subr.mxu0 0.0
    %122 = vmatpush1.xpose.msra.mxu0 %v78
    %123 = vmatprep.subr.mxu0 0.0
    %124 = vmatpush1.xpose.msra.mxu0 %v81
    %125 = vmatprep.subr.mxu0 0.0
    %126 = vmatpush1.xpose.msra.mxu0 %v84
    %127 = vmatprep.subr.mxu0 0.0
    %128 = vmatpush1.xpose.msra.mxu0 %v87
    %129 = vmatprep.subr.mxu0 0.0
    %130 = vmatpush1.xpose.msra.mxu0 %v90
    %131 = vmatprep.subr.mxu0 0.0
    %132 = vmatpush1.xpose.msra.mxu0 %v93
    %133 = vmatprep.subr.mxu0 0.0
    %134 = vmatpush1.xpose.msra.mxu0 %v96
    %135 = vmatprep.subr.mxu0 0.0
    %136 = vmatpush1.xpose.msra.mxu0 %v99
    %137 = vmatprep.subr.mxu0 0.0
    %138 = vmatpush1.xpose.msra.mxu0 %v102
    %139 = vmatprep.subr.mxu0 0.0
    %140 = vmatpush1.xpose.msra.mxu0 %v105
    %141 = vmatprep.subr.mxu0 0.0
    %142 = vmatpush1.xpose.msra.mxu0 %v108
    %143 = vmatprep.subr.mxu0 0.0
    %144 = vmatpush1.xpose.msra.mxu0 %v111
    %145 = vmatprep.subr.mxu0 0.0
    %146 = vmatpush1.xpose.msra.mxu0 0.0
    %147 = vmatprep.subr.mxu0 0.0
    %148 = vmatpush1.xpose.msra.mxu0 0.0
    %149 = vmatprep.subr.mxu0 0.0
    %150 = vmatpush1.xpose.msra.mxu0 0.0
    %151 = vmatprep.subr.mxu0 0.0
    %152 = vmatpush1.xpose.msra.mxu0 0.0
    %153 = vmatprep.subr.mxu0 0.0
    %154 = vmatpush1.xpose.msra.mxu0 0.0
    %155 = vmatprep.subr.mxu0 0.0
    %156 = vmatpush1.xpose.msra.mxu0 0.0
    %157 = vmatprep.subr.mxu0 0.0
    %158 = vmatpush1.xpose.msra.mxu0 0.0
    %159 = vmatprep.subr.mxu0 0.0
    %160 = vmatpush1.xpose.msra.mxu0 0.0
    %161 = vmatprep.subr.mxu0 0.0
    %162 = vmatpush1.xpose.msra.mxu0 0.0
    %163 = vmatprep.subr.mxu0 0.0
    %164 = vmatpush1.xpose.msra.mxu0 0.0
    %165 = vmatprep.subr.mxu0 0.0
    %166 = vmatpush1.xpose.msra.mxu0 0.0
    %167 = vmatprep.subr.mxu0 0.0
    %168 = vmatpush1.xpose.msra.mxu0 0.0
    %169 = vmatprep.subr.mxu0 0.0
    %170 = vmatpush1.xpose.msra.mxu0 0.0
    %171 = vmatprep.subr.mxu0 0.0
    %172 = vmatpush1.xpose.msra.mxu0 0.0
    %173 = vmatprep.subr.mxu0 0.0
    %174 = vmatpush1.xpose.msra.mxu0 0.0
    %175 = vmatprep.subr.mxu0 0.0
    %176 = vmatpush1.xpose.msra.mxu0 0.0
    %177 = vmatprep.mubr.f32.mxu0 0.0
    %178 = vmatmul.mubr.f32.gmra.mrb[0].mxu0 %v60
    %v179 = vpop.f32.mrb[0].mxu0
    %v180 = vadd.f32 0.0, %v179
    %v181 = vpop.f32.mrb[0].mxu0
    %182 = vmatprep.mubr.f32.mxu0 0.0
    %183 = vmatmul.mubr.f32.gmra.mrb[0].mxu0 %v63
    %v184 = vpop.f32.mrb[0].mxu0
    %v185 = vadd.f32 0.0, %v184
    %v186 = vpop.f32.mrb[0].mxu0
    %187 = vdwg.mxu0
    %188 = vst [vmem:[#allocation7] sm:$0xff] %v180
    %189 = vst [vmem:[#allocation7 + $0x8] sm:$0xff] %v185
    // Predicated region
    $region18: #{tpu_custom_call.1} parent=1 // pred_check
      _
    $region19: #{tpu_custom_call.1} parent=1 // pred_check_branch
      %191 = sbr.rel (0) target = $region21
    $region20: #{tpu_custom_call.1} parent=1 // pred_region
      %s193 = ssub.s32 256, 256
      %194 = vsyncadd [#allocation4], %s193
      %s195 = sshll.u32 [#allocation7], 4
      %s196 = int_to_ptr.vmem [resolvable:$true] %s195
      %201 = dma.vmem_to_hbm [thread:$0]  %s196, 256, %s2, [#allocation4], 128, 128, 8
    $region21: #{tpu_custom_call.1} parent=1 // pred_fallthru
      _
    // Predicated region
    $region22: #{tpu_custom_call.1} parent=1 // pred_check
      _
    $region23: #{tpu_custom_call.1} parent=1 // pred_check_branch
      %203 = sbr.rel (0) target = $region25
    $region24: #{tpu_custom_call.1} parent=1 // pred_region
      %204 = dma.done [#allocation4], 256
    $region25: #{tpu_custom_call.1} parent=1 // pred_fallthru
      _
    %205 = vsyncpa [#allocation3], 1
    %206 = vsyncpa [#allocation6], 1
    %207 = vsyncpa [#allocation4], 1

</llo_original>
